<compile_context>
chip_gen: v7x
topology: tpu7x:2x2x1
jax: 0.10.0
libtpu: 0.0.40
codegen_flags: <defaults>
</compile_context>

<pallas_src>
import functools

import jax
import jax.numpy as jnp
from jax import lax
from jax.experimental import pallas as pl
from jax.experimental.pallas import tpu as pltpu


def _gbn_kernel(bias_ref, std_ref, x_ref, o_ref, *, eps, g, chunk_n):
    """One block = `g` whole ghost batches x one lane-dense feature stripe."""
    bias = bias_ref[0]
    std = std_ref[0]

    x = x_ref[...]                                # (g*chunk_n, tile_c)
    tile_c = x.shape[-1]
    xg = x.reshape(g, chunk_n, tile_c)            # leading-dim split: layout free

    if x.dtype == jnp.float32:
        # f32 path: reuse `centered` for both the variance and the
        # normalization (no duplicate x - mean, no one-pass cancellation).
        mean = jnp.mean(xg, axis=1, keepdims=True)                    # (g,1,tc)
        centered = xg - mean
        var = jnp.mean(centered * centered, axis=1, keepdims=True)    # biased (BN)
        scale = std * lax.rsqrt(var + eps)
        y = centered * scale + bias * std
    else:
        # 16-bit path (bf16/f16): keep the big elementwise passes in the input
        # dtype (no full f32 copy of the block); accumulate statistics in f32.
        mean32 = jnp.mean(xg, axis=1, keepdims=True, dtype=jnp.float32)
        centered = xg - mean32.astype(x.dtype)
        var32 = jnp.mean(centered * centered, axis=1, keepdims=True,
                         dtype=jnp.float32)
        scale = (std * lax.rsqrt(var32 + eps)).astype(x.dtype)        # (g,1,tc)
        shift = (bias * std).astype(x.dtype)                          # scalar
        y = centered * scale + shift

    o_ref[...] = y.reshape(g * chunk_n, tile_c).astype(o_ref.dtype)


def _vmem_limit_bytes():
    """Scoped-VMEM limit derived from the generation's physical VMEM."""
    try:
        phys = int(pltpu.get_tpu_info().vmem_capacity_bytes)
    except Exception:
        phys = 64 * 1024 * 1024  # assume the smallest (v7x per-TC) if unknown
    # v7x (64 MiB)  -> 48 MiB scoped;  v5e/v6e (128 MiB) -> 96 MiB scoped.
    return int(min(phys * 3 // 4, 96 * 1024 * 1024))


def _pick_tile_c(c_pad, chunk_n, itemsize, max_block_bytes):
    """Largest 128-multiple feature tile dividing c_pad that fits the budget.

    Prefers tile_c == c_pad: a fully contiguous (chunk_n, C) slab (no row
    stride in the HBM access pattern, fewer grid steps).
    """
    if chunk_n * c_pad * itemsize <= max_block_bytes:
        return c_pad
    cap = (max_block_bytes // max(1, chunk_n * itemsize)) // 128 * 128
    tile = min(c_pad, max(128, cap))
    while tile > 128 and c_pad % tile != 0:
        tile -= 128
    # TODO(synk): if chunk_n*128*itemsize still exceeds the budget, switch to
    # a two-pass sum / sum-of-squares scheme with row tiling.
    return tile  # c_pad % 128 == 0, so tile == 128 always divides


def _pick_ghosts_per_block(divider, per_ghost_bytes, max_block_bytes,
                           target_block_bytes=2 * 1024 * 1024):
    """Pack ghost batches per block until the DMA is big enough (~2 MiB) to
    amortize per-grid-step overhead, without blowing the VMEM block budget."""
    best = 1
    for d in range(1, divider + 1):
        if divider % d:
            continue
        if per_ghost_bytes * d > max_block_bytes:
            break
        best = d
        if per_ghost_bytes * d >= target_block_bytes:
            break
    return best


def ghost_batch_norm_1d(x, bias, std, *, divider=4, eps=1e-5,
                        tile_c=None, ghosts_per_block=None):
    """x: (N, C); bias, std: (1,) scalars. Returns (N, C)."""
    N, C = x.shape
    # TODO(synk): torch.chunk allows a ragged last ghost batch when
    # N % divider != 0; this kernel assumes equal-sized ghost batches.
    assert N % divider == 0, "batch must be divisible by divider"
    chunk_n = N // divider
    itemsize = x.dtype.itemsize

    # (8, 128) block rule: ghost-batch rows sit on sublanes.
    sublane = {4: 8, 2: 16, 1: 32}.get(itemsize, 8)
    assert chunk_n % sublane == 0 or divider == 1, (
        "ghost-batch rows must be sublane aligned")
    # TODO(synk): pad rows per ghost batch for unaligned chunk_n.

    # Pad features to a multiple of 128 so every tile is lane dense
    # (unmasked vst store path); padded columns are sliced off below.
    c_pad = ((C + 127) // 128) * 128
    x_in = x if c_pad == C else jnp.pad(x, ((0, 0), (0, c_pad - C)))

    vmem_limit = _vmem_limit_bytes()
    # Per-block budget: ~2x double-buffered in + out plus ~3x block of
    # same-dtype temporaries must stay comfortably under the scoped limit.
    max_block_bytes = max(1 << 20, vmem_limit // 12)

    if tile_c is None:
        tile_c = _pick_tile_c(c_pad, chunk_n, itemsize, max_block_bytes)
    assert c_pad % tile_c == 0 and tile_c % 128 == 0, "bad tile_c"
    num_c_tiles = c_pad // tile_c

    if ghosts_per_block is None:
        g = _pick_ghosts_per_block(divider, chunk_n * tile_c * itemsize,
                                   max_block_bytes)
    else:
        g = ghosts_per_block
    assert divider % g == 0, "ghosts_per_block must divide divider"
    num_slabs = divider // g
    block_rows = g * chunk_n

    kernel = functools.partial(_gbn_kernel, eps=eps, g=g, chunk_n=chunk_n)

    out = pl.pallas_call(
        kernel,
        out_shape=jax.ShapeDtypeStruct((N, c_pad), x.dtype),
        # Row-slab axis leads so the axis that actually has extent > 1 is the
        # one megacore shards when tile_c == c_pad makes num_c_tiles == 1.
        grid=(num_slabs, num_c_tiles),
        in_specs=[
            pl.BlockSpec(memory_space=pltpu.MemorySpace.SMEM),   # bias (1,)
            pl.BlockSpec(memory_space=pltpu.MemorySpace.SMEM),   # std  (1,)
            pl.BlockSpec((block_rows, tile_c), lambda ib, jc: (ib, jc)),
        ],
        out_specs=pl.BlockSpec((block_rows, tile_c), lambda ib, jc: (ib, jc)),
        compiler_params=pltpu.CompilerParams(
            dimension_semantics=("parallel", "parallel"),
            vmem_limit_bytes=vmem_limit,
        ),
    )(bias, std, x_in)

    return out if c_pad == C else out[:, :C]


def _reference(x, bias, std, *, divider=4, eps=1e-5):
    N, C = x.shape
    xs = x.reshape(divider, N // divider, C).astype(jnp.float32)
    mean = jnp.mean(xs, axis=1, keepdims=True)
    var = jnp.mean((xs - mean) ** 2, axis=1, keepdims=True)
    x_hat = (xs - mean) / jnp.sqrt(var + eps)
    y = (x_hat + bias[0]) * std[0]
    return y.reshape(N, C).astype(x.dtype)


if __name__ == "__main__":
    key = jax.random.PRNGKey(0)
    k1, k2, k3, k4 = jax.random.split(key, 4)

    # Deterministic parameter init per the module's __init__:
    bias0 = jnp.zeros((1,), dtype=jnp.float32)   # nn.Parameter(torch.zeros(1))
    std0 = jnp.ones((1,), dtype=jnp.float32)     # nn.Parameter(torch.ones(1))

    # Case 1: f32, C multiple of 128, auto tiling (single packed slab).
    x1 = jax.random.normal(k1, (64, 256), dtype=jnp.float32) * 2.0 + 0.5
    y1 = jax.block_until_ready(ghost_batch_norm_1d(x1, bias0, std0, divider=4))
    assert jnp.allclose(y1, _reference(x1, bias0, std0, divider=4),
                        atol=1e-5, rtol=1e-5), "case 1 mismatch"

    # Case 2: non-trivial bias/std, explicit tile_c and ghost packing so the
    # grid is genuinely 2-D with a packed (g=2) row slab: grid = (2, 4).
    bias1 = jnp.full((1,), 0.3, dtype=jnp.float32)
    std1 = jnp.full((1,), 1.7, dtype=jnp.float32)
    x2 = jax.random.normal(k2, (32, 512), dtype=jnp.float32)
    y2 = jax.block_until_ready(
        ghost_batch_norm_1d(x2, bias1, std1, divider=4,
                            tile_c=128, ghosts_per_block=2))
    assert jnp.allclose(y2, _reference(x2, bias1, std1, divider=4),
                        atol=1e-5, rtol=1e-5), "case 2 mismatch"

    # Case 3: C not a multiple of 128 -> wrapper pads features and slices back.
    x3 = jax.random.normal(k3, (64, 200), dtype=jnp.float32) + 1.0
    y3 = jax.block_until_ready(ghost_batch_norm_1d(x3, bias1, std1, divider=4))
    assert jnp.allclose(y3, _reference(x3, bias1, std1, divider=4),
                        atol=1e-5, rtol=1e-5), "case 3 mismatch"

    # Case 4: bf16 input exercises the no-f32-copy elementwise path.
    x4 = (jax.random.normal(k4, (128, 256), dtype=jnp.float32) * 1.5
          - 0.25).astype(jnp.bfloat16)
    y4 = jax.block_until_ready(ghost_batch_norm_1d(x4, bias1, std1, divider=4))
    y4_ref = _reference(x4.astype(jnp.float32), bias1, std1, divider=4)
    assert jnp.allclose(y4.astype(jnp.float32), y4_ref,
                        atol=0.1, rtol=0.1), "case 4 mismatch"

    print("KERNEL_OK")
</pallas_src>

<mosaic_0001>
module attributes {stable_mosaic.version = 11 : i64} {
  func.func @_gbn_kernel(%arg0: i32, %arg1: i32, %arg2: memref<1xf32, #tpu.memory_space<smem>>, %arg3: memref<1xf32, #tpu.memory_space<smem>>, %arg4: memref<64x256xf32, #tpu.memory_space<vmem>>, %arg5: memref<64x256xf32, #tpu.memory_space<vmem>>) attributes {dimension_semantics = [#tpu.dimension_semantics<parallel>, #tpu.dimension_semantics<parallel>], iteration_bounds = array<i64: 1, 1>, scalar_prefetch = 0 : i64, scratch_operands = 0 : i64, tpu.core_type = #tpu.core_type<tc>, window_params = [{transform_indices = @transform_0, window_bounds = array<i64: 1>}, {transform_indices = @transform_1, window_bounds = array<i64: 1>}, {transform_indices = @transform_2, window_bounds = array<i64: 64, 256>}, {transform_indices = @transform_3, window_bounds = array<i64: 64, 256>}]} {
    %c0 = arith.constant 0 : index
    %0 = memref.load %arg2[%c0] : memref<1xf32, #tpu.memory_space<smem>>
    %c0_0 = arith.constant 0 : index
    %1 = memref.load %arg3[%c0_0] : memref<1xf32, #tpu.memory_space<smem>>
    %c0_1 = arith.constant 0 : index
    %c0_2 = arith.constant 0 : index
    %2 = vector.load %arg4[%c0_1, %c0_2] : memref<64x256xf32, #tpu.memory_space<vmem>>, vector<64x256xf32>
    %3 = vector.shape_cast %2 : vector<64x256xf32> to vector<4x16x256xf32>
    %cst = arith.constant dense<0.000000e+00> : vector<4x256xf32>
    %4 = vector.multi_reduction <add>, %3, %cst [1] : vector<4x16x256xf32> to vector<4x256xf32>
    %5 = vector.shape_cast %4 : vector<4x256xf32> to vector<4x1x256xf32>
    %cst_3 = arith.constant 1.600000e+01 : f32
    %6 = vector.broadcast %cst_3 : f32 to vector<4x1x256xf32>
    %7 = arith.divf %5, %6 : vector<4x1x256xf32>
    %8 = vector.broadcast %7 : vector<4x1x256xf32> to vector<4x16x256xf32>
    %9 = arith.subf %3, %8 : vector<4x16x256xf32>
    %10 = arith.mulf %9, %9 : vector<4x16x256xf32>
    %cst_4 = arith.constant dense<0.000000e+00> : vector<4x256xf32>
    %11 = vector.multi_reduction <add>, %10, %cst_4 [1] : vector<4x16x256xf32> to vector<4x256xf32>
    %12 = vector.shape_cast %11 : vector<4x256xf32> to vector<4x1x256xf32>
    %cst_5 = arith.constant 1.600000e+01 : f32
    %13 = vector.broadcast %cst_5 : f32 to vector<4x1x256xf32>
    %14 = arith.divf %12, %13 : vector<4x1x256xf32>
    %cst_6 = arith.constant 9.99999974E-6 : f32
    %15 = vector.broadcast %cst_6 : f32 to vector<4x1x256xf32>
    %16 = arith.addf %14, %15 : vector<4x1x256xf32>
    %17 = math.rsqrt %16 : vector<4x1x256xf32>
    %18 = vector.broadcast %1 : f32 to vector<4x1x256xf32>
    %19 = arith.mulf %18, %17 : vector<4x1x256xf32>
    %20 = vector.broadcast %19 : vector<4x1x256xf32> to vector<4x16x256xf32>
    %21 = arith.mulf %9, %20 : vector<4x16x256xf32>
    %22 = arith.mulf %0, %1 : f32
    %23 = vector.broadcast %22 : f32 to vector<4x16x256xf32>
    %24 = arith.addf %21, %23 : vector<4x16x256xf32>
    %25 = vector.shape_cast %24 : vector<4x16x256xf32> to vector<64x256xf32>
    %c0_7 = arith.constant 0 : index
    %c0_8 = arith.constant 0 : index
    %26 = vector.load %arg5[%c0_7, %c0_8] : memref<64x256xf32, #tpu.memory_space<vmem>>, vector<64x256xf32>
    tpu.vector_store %arg5[%c0_7, %c0_8], %25 {strides = array<i32>} : memref<64x256xf32, #tpu.memory_space<vmem>>, vector<64x256xf32>,
    return
  }
  func.func @transform_0(%arg0: i32, %arg1: i32) -> i32 {
    %c0_i32 = arith.constant 0 : i32
    %c0_i32_0 = arith.constant 0 : i32
    return %c0_i32 : i32
  }
  func.func @transform_1(%arg0: i32, %arg1: i32) -> i32 {
    %c0_i32 = arith.constant 0 : i32
    %c0_i32_0 = arith.constant 0 : i32
    return %c0_i32 : i32
  }
  func.func @transform_2(%arg0: i32, %arg1: i32) -> (i32, i32) {
    %c0_i32 = arith.constant 0 : i32
    return %arg0, %arg1 : i32, i32
  }
  func.func @transform_3(%arg0: i32, %arg1: i32) -> (i32, i32) {
    %c0_i32 = arith.constant 0 : i32
    return %arg0, %arg1 : i32, i32
  }
}

</mosaic_0001>

<llo_original>
// kernel: tpu_custom_call.1
$region0: #{tpu_custom_call.1}
  #allocation0 [shape = 'u32[]', space=smem, size = 0x4, offset = 0x4, fixed_abs, tag = 'smem constant byte address 0x4 - core index']
  #allocation1 [shape = 'u32[144,128]{1,0:T(1,128)}', space=vmem, size = 0x12000, scoped, tag = 'internal scratch']
  #allocation2 [shape = 'f32[1]{0:T(128)S(6)}', space=smem, size = 0x200, scoped, tag = 'scoped memory for tpu_custom_call.1']
  #allocation3 [shape = 'f32[1]{0:T(128)S(6)}', space=smem, size = 0x200, scoped, tag = 'scoped memory for tpu_custom_call.1']
  %s0 = inlined_call_operand.<no memory space> [shape: f32[1], index: 0, kind: input, shape index: {}]
  %s1 = inlined_call_operand.<no memory space> [shape: f32[1], index: 1, kind: input, shape index: {}]
  %s2 = inlined_call_operand.hbm [shape: f32[64,256], index: 2, kind: input, shape index: {}]
  %s3 = inlined_call_operand.hbm [shape: f32[64,256], index: 3, kind: output, shape index: {}]
  %s4 = sld [smem:[#allocation0]]
  $region26: #{tpu_custom_call.1} parent=0
    _
  %s6 = ssub.s32 1, %s4
  %s7 = scalar_select 0, %s6, %s4
  %8 = sst [smem:[#allocation2]] %s0
  %9 = sst [smem:[#allocation3]] %s1
  $region1: #{tpu_custom_call.1} parent=0
    #allocation4 [shape = 'u8[65536]{0}', space=vmem, size = 0x10000, scoped, tag = 'input window, operand 2, single buffered']
    #allocation5 [shape = 's32[1]{0}', space=sflag, size = 0x4, scoped, tag = 'scoped memory for tpu_custom_call.1']
    #allocation6 [shape = 's32[1]{0}', space=sflag, size = 0x4, scoped, tag = 'scoped memory for tpu_custom_call.1']
    #allocation7 [shape = 'u8[65536]{0}', space=vmem, size = 0x10000, scoped, tag = 'output window, operand 0, single buffered']
    %10 = vsyncpa [#allocation5], 0
    %11 = vsyncpa [#allocation6], 0
    // Predicated region
    $region2: #{tpu_custom_call.1} parent=1 // pred_check
      _
    $region3: #{tpu_custom_call.1} parent=1 // pred_check_branch
      %13 = sbr.rel (0) target = $region5
    $region4: #{tpu_custom_call.1} parent=1 // pred_region
      _
    $region5: #{tpu_custom_call.1} parent=1 // pred_fallthru
      _
    // Predicated region
    $region6: #{tpu_custom_call.1} parent=1 // pred_check
      _
    $region7: #{tpu_custom_call.1} parent=1 // pred_check_branch
      %15 = sbr.rel (0) target = $region9
    $region8: #{tpu_custom_call.1} parent=1 // pred_region
      _
    $region9: #{tpu_custom_call.1} parent=1 // pred_fallthru
      _
    // Predicated region
    $region10: #{tpu_custom_call.1} parent=1 // pred_check
      _
    $region11: #{tpu_custom_call.1} parent=1 // pred_check_branch
      %17 = sbr.rel (0) target = $region13
    $region12: #{tpu_custom_call.1} parent=1 // pred_region
      %s19 = ssub.s32 2048, 2048
      %20 = vsyncadd [#allocation5], %s19
      %s21 = sshll.u32 [#allocation4], 4
      %s22 = int_to_ptr.vmem [resolvable:$true] %s21
      %27 = dma.hbm_to_vmem [thread:$0]  %s2, 2048, %s22, [#allocation5], 256, 256, 16
    $region13: #{tpu_custom_call.1} parent=1 // pred_fallthru
      _
    // Predicated region
    $region14: #{tpu_custom_call.1} parent=1 // pred_check
      _
    $region15: #{tpu_custom_call.1} parent=1 // pred_check_branch
      %29 = sbr.rel (0) target = $region17
    $region16: #{tpu_custom_call.1} parent=1 // pred_region
      %30 = dma.done [#allocation5], 2048
    $region17: #{tpu_custom_call.1} parent=1 // pred_fallthru
      _
    %s31 = sld [smem:[#allocation2]]
    %s32 = sld [smem:[#allocation3]]
    %v33 = vld [vmem:[#allocation4] sm:$0xff]
    %v34 = vld [vmem:[#allocation4 + $0x8] sm:$0xff]
    %v35 = vld [vmem:[#allocation4 + $0x10] sm:$0xff]
    %v36 = vld [vmem:[#allocation4 + $0x18] sm:$0xff]
    %v37 = vld [vmem:[#allocation4 + $0x20] sm:$0xff]
    %v38 = vld [vmem:[#allocation4 + $0x28] sm:$0xff]
    %v39 = vld [vmem:[#allocation4 + $0x30] sm:$0xff]
    %v40 = vld [vmem:[#allocation4 + $0x38] sm:$0xff]
    %v41 = vld [vmem:[#allocation4 + $0x40] sm:$0xff]
    %v42 = vld [vmem:[#allocation4 + $0x48] sm:$0xff]
    %v43 = vld [vmem:[#allocation4 + $0x50] sm:$0xff]
    %v44 = vld [vmem:[#allocation4 + $0x58] sm:$0xff]
    %v45 = vld [vmem:[#allocation4 + $0x60] sm:$0xff]
    %v46 = vld [vmem:[#allocation4 + $0x68] sm:$0xff]
    %v47 = vld [vmem:[#allocation4 + $0x70] sm:$0xff]
    %v48 = vld [vmem:[#allocation4 + $0x78] sm:$0xff]
    %v49 = vadd.f32 %v33, %v35
    %v50 = vrot.slane %v49, 4
    %v51 = vadd.f32 %v49, %v50
    %v52 = vrot.slane %v51, 2
    %v53 = vadd.f32 %v51, %v52
    %v54 = vrot.slane %v53, 1
    %v55 = vadd.f32 %v53, %v54
    %v56 = vadd.f32 %v34, %v36
    %v57 = vrot.slane %v56, 4
    %v58 = vadd.f32 %v56, %v57
    %v59 = vrot.slane %v58, 2
    %v60 = vadd.f32 %v58, %v59
    %v61 = vrot.slane %v60, 1
    %v62 = vadd.f32 %v60, %v61
    %v63 = vadd.f32 %v37, %v39
    %v64 = vrot.slane %v63, 4
    %v65 = vadd.f32 %v63, %v64
    %v66 = vrot.slane %v65, 2
    %v67 = vadd.f32 %v65, %v66
    %v68 = vrot.slane %v67, 1
    %v69 = vadd.f32 %v67, %v68
    %v70 = vadd.f32 %v38, %v40
    %v71 = vrot.slane %v70, 4
    %v72 = vadd.f32 %v70, %v71
    %v73 = vrot.slane %v72, 2
    %v74 = vadd.f32 %v72, %v73
    %v75 = vrot.slane %v74, 1
    %v76 = vadd.f32 %v74, %v75
    %v77 = vadd.f32 %v41, %v43
    %v78 = vrot.slane %v77, 4
    %v79 = vadd.f32 %v77, %v78
    %v80 = vrot.slane %v79, 2
    %v81 = vadd.f32 %v79, %v80
    %v82 = vrot.slane %v81, 1
    %v83 = vadd.f32 %v81, %v82
    %v84 = vadd.f32 %v42, %v44
    %v85 = vrot.slane %v84, 4
    %v86 = vadd.f32 %v84, %v85
    %v87 = vrot.slane %v86, 2
    %v88 = vadd.f32 %v86, %v87
    %v89 = vrot.slane %v88, 1
    %v90 = vadd.f32 %v88, %v89
    %v91 = vadd.f32 %v45, %v47
    %v92 = vrot.slane %v91, 4
    %v93 = vadd.f32 %v91, %v92
    %v94 = vrot.slane %v93, 2
    %v95 = vadd.f32 %v93, %v94
    %v96 = vrot.slane %v95, 1
    %v97 = vadd.f32 %v95, %v96
    %v98 = vadd.f32 %v46, %v48
    %v99 = vrot.slane %v98, 4
    %v100 = vadd.f32 %v98, %v99
    %v101 = vrot.slane %v100, 2
    %v102 = vadd.f32 %v100, %v101
    %v103 = vrot.slane %v102, 1
    %v104 = vadd.f32 %v102, %v103
    %v105 = vrcp.pop 16.0
    %v106 = vmul.f32 %v55, %v105
    %v107 = vmul.f32 %v62, %v105
    %v108 = vmul.f32 %v69, %v105
    %v109 = vmul.f32 %v76, %v105
    %v110 = vmul.f32 %v83, %v105
    %v111 = vmul.f32 %v90, %v105
    %v112 = vmul.f32 %v97, %v105
    %v113 = vmul.f32 %v104, %v105
    %v114 = vsub.f32 %v33, %v106
    %v115 = vsub.f32 %v34, %v107
    %v116 = vsub.f32 %v35, %v106
    %v117 = vsub.f32 %v36, %v107
    %v118 = vsub.f32 %v37, %v108
    %v119 = vsub.f32 %v38, %v109
    %v120 = vsub.f32 %v39, %v108
    %v121 = vsub.f32 %v40, %v109
    %v122 = vsub.f32 %v41, %v110
    %v123 = vsub.f32 %v42, %v111
    %v124 = vsub.f32 %v43, %v110
    %v125 = vsub.f32 %v44, %v111
    %v126 = vsub.f32 %v45, %v112
    %v127 = vsub.f32 %v46, %v113
    %v128 = vsub.f32 %v47, %v112
    %v129 = vsub.f32 %v48, %v113
    %v130 = vmul.f32 %v114, %v114
    %v131 = vmul.f32 %v115, %v115
    %v132 = vmul.f32 %v116, %v116
    %v133 = vmul.f32 %v117, %v117
    %v134 = vmul.f32 %v118, %v118
    %v135 = vmul.f32 %v119, %v119
    %v136 = vmul.f32 %v120, %v120
    %v137 = vmul.f32 %v121, %v121
    %v138 = vmul.f32 %v122, %v122
    %v139 = vmul.f32 %v123, %v123
    %v140 = vmul.f32 %v124, %v124
    %v141 = vmul.f32 %v125, %v125
    %v142 = vmul.f32 %v126, %v126
    %v143 = vmul.f32 %v127, %v127
    %v144 = vmul.f32 %v128, %v128
    %v145 = vmul.f32 %v129, %v129
    %v146 = vadd.f32 %v130, %v132
    %v147 = vrot.slane %v146, 4
    %v148 = vadd.f32 %v146, %v147
    %v149 = vrot.slane %v148, 2
    %v150 = vadd.f32 %v148, %v149
    %v151 = vrot.slane %v150, 1
    %v152 = vadd.f32 %v150, %v151
    %v153 = vadd.f32 %v131, %v133
    %v154 = vrot.slane %v153, 4
    %v155 = vadd.f32 %v153, %v154
    %v156 = vrot.slane %v155, 2
    %v157 = vadd.f32 %v155, %v156
    %v158 = vrot.slane %v157, 1
    %v159 = vadd.f32 %v157, %v158
    %v160 = vadd.f32 %v134, %v136
    %v161 = vrot.slane %v160, 4
    %v162 = vadd.f32 %v160, %v161
    %v163 = vrot.slane %v162, 2
    %v164 = vadd.f32 %v162, %v163
    %v165 = vrot.slane %v164, 1
    %v166 = vadd.f32 %v164, %v165
    %v167 = vadd.f32 %v135, %v137
    %v168 = vrot.slane %v167, 4
    %v169 = vadd.f32 %v167, %v168
    %v170 = vrot.slane %v169, 2
    %v171 = vadd.f32 %v169, %v170
    %v172 = vrot.slane %v171, 1
    %v173 = vadd.f32 %v171, %v172
    %v174 = vadd.f32 %v138, %v140
    %v175 = vrot.slane %v174, 4
    %v176 = vadd.f32 %v174, %v175
    %v177 = vrot.slane %v176, 2
    %v178 = vadd.f32 %v176, %v177
    %v179 = vrot.slane %v178, 1
    %v180 = vadd.f32 %v178, %v179
    %v181 = vadd.f32 %v139, %v141
    %v182 = vrot.slane %v181, 4
    %v183 = vadd.f32 %v181, %v182
    %v184 = vrot.slane %v183, 2
    %v185 = vadd.f32 %v183, %v184
    %v186 = vrot.slane %v185, 1
    %v187 = vadd.f32 %v185, %v186
    %v188 = vadd.f32 %v142, %v144
    %v189 = vrot.slane %v188, 4
    %v190 = vadd.f32 %v188, %v189
    %v191 = vrot.slane %v190, 2
    %v192 = vadd.f32 %v190, %v191
    %v193 = vrot.slane %v192, 1
    %v194 = vadd.f32 %v192, %v193
    %v195 = vadd.f32 %v143, %v145
    %v196 = vrot.slane %v195, 4
    %v197 = vadd.f32 %v195, %v196
    %v198 = vrot.slane %v197, 2
    %v199 = vadd.f32 %v197, %v198
    %v200 = vrot.slane %v199, 1
    %v201 = vadd.f32 %v199, %v200
    %v202 = vmul.f32 %v152, %v105
    %v203 = vmul.f32 %v159, %v105
    %v204 = vmul.f32 %v166, %v105
    %v205 = vmul.f32 %v173, %v105
    %v206 = vmul.f32 %v180, %v105
    %v207 = vmul.f32 %v187, %v105
    %v208 = vmul.f32 %v194, %v105
    %v209 = vmul.f32 %v201, %v105
    %v210 = vadd.f32 %v202, 1e-05
    %v211 = vadd.f32 %v203, 1e-05
    %v212 = vadd.f32 %v204, 1e-05
    %v213 = vadd.f32 %v205, 1e-05
    %v214 = vadd.f32 %v206, 1e-05
    %v215 = vadd.f32 %v207, 1e-05
    %v216 = vadd.f32 %v208, 1e-05
    %v217 = vadd.f32 %v209, 1e-05
    %v218 = vrsqrt.pop %v210
    %v219 = vrsqrt.pop %v211
    %v220 = vrsqrt.pop %v212
    %v221 = vrsqrt.pop %v213
    %v222 = vrsqrt.pop %v214
    %v223 = vrsqrt.pop %v215
    %v224 = vrsqrt.pop %v216
    %v225 = vrsqrt.pop %v217
    %v226 = vstv %s32
    %v227 = vmul.f32 %v226, %v218
    %v228 = vmul.f32 %v226, %v219
    %v229 = vmul.f32 %v226, %v220
    %v230 = vmul.f32 %v226, %v221
    %v231 = vmul.f32 %v226, %v222
    %v232 = vmul.f32 %v226, %v223
    %v233 = vmul.f32 %v226, %v224
    %v234 = vmul.f32 %v226, %v225
    %v235 = vmul.f32 %v114, %v227
    %v236 = vmul.f32 %v115, %v228
    %v237 = vmul.f32 %v116, %v227
    %v238 = vmul.f32 %v117, %v228
    %v239 = vmul.f32 %v118, %v229
    %v240 = vmul.f32 %v119, %v230
    %v241 = vmul.f32 %v120, %v229
    %v242 = vmul.f32 %v121, %v230
    %v243 = vmul.f32 %v122, %v231
    %v244 = vmul.f32 %v123, %v232
    %v245 = vmul.f32 %v124, %v231
    %v246 = vmul.f32 %v125, %v232
    %v247 = vmul.f32 %v126, %v233
    %v248 = vmul.f32 %v127, %v234
    %v249 = vmul.f32 %v128, %v233
    %v250 = vmul.f32 %v129, %v234
    %s251 = smul.f32 %s31, %s32
    %v252 = vstv %s251
    %v253 = vadd.f32 %v235, %v252
    %v254 = vadd.f32 %v236, %v252
    %v255 = vadd.f32 %v237, %v252
    %v256 = vadd.f32 %v238, %v252
    %v257 = vadd.f32 %v239, %v252
    %v258 = vadd.f32 %v240, %v252
    %v259 = vadd.f32 %v241, %v252
    %v260 = vadd.f32 %v242, %v252
    %v261 = vadd.f32 %v243, %v252
    %v262 = vadd.f32 %v244, %v252
    %v263 = vadd.f32 %v245, %v252
    %v264 = vadd.f32 %v246, %v252
    %v265 = vadd.f32 %v247, %v252
    %v266 = vadd.f32 %v248, %v252
    %v267 = vadd.f32 %v249, %v252
    %v268 = vadd.f32 %v250, %v252
    %269 = vst [vmem:[#allocation7] sm:$0xff] %v253
    %270 = vst [vmem:[#allocation7 + $0x8] sm:$0xff] %v254
    %271 = vst [vmem:[#allocation7 + $0x10] sm:$0xff] %v255
    %272 = vst [vmem:[#allocation7 + $0x18] sm:$0xff] %v256
    %273 = vst [vmem:[#allocation7 + $0x20] sm:$0xff] %v257
    %274 = vst [vmem:[#allocation7 + $0x28] sm:$0xff] %v258
    %275 = vst [vmem:[#allocation7 + $0x30] sm:$0xff] %v259
    %276 = vst [vmem:[#allocation7 + $0x38] sm:$0xff] %v260
    %277 = vst [vmem:[#allocation7 + $0x40] sm:$0xff] %v261
    %278 = vst [vmem:[#allocation7 + $0x48] sm:$0xff] %v262
    %279 = vst [vmem:[#allocation7 + $0x50] sm:$0xff] %v263
    %280 = vst [vmem:[#allocation7 + $0x58] sm:$0xff] %v264
    %281 = vst [vmem:[#allocation7 + $0x60] sm:$0xff] %v265
    %282 = vst [vmem:[#allocation7 + $0x68] sm:$0xff] %v266
    %283 = vst [vmem:[#allocation7 + $0x70] sm:$0xff] %v267
    %284 = vst [vmem:[#allocation7 + $0x78] sm:$0xff] %v268
    // Predicated region
    $region18: #{tpu_custom_call.1} parent=1 // pred_check
      _
    $region19: #{tpu_custom_call.1} parent=1 // pred_check_branch
      %286 = sbr.rel (0) target = $region21
    $region20: #{tpu_custom_call.1} parent=1 // pred_region
      %s288 = ssub.s32 2048, 2048
      %289 = vsyncadd [#allocation6], %s288
      %s290 = sshll.u32 [#allocation7], 4
      %s291 = int_to_ptr.vmem [resolvable:$true] %s290
      %296 = dma.vmem_to_hbm [thread:$0]  %s291, 2048, %s3, [#allocation6], 256, 256, 16
    $region21: #{tpu_custom_call.1} parent=1 // pred_fallthru
      _
    // Predicated region
    $region22: #{tpu_custom_call.1} parent=1 // pred_check
      _
    $region23: #{tpu_custom_call.1} parent=1 // pred_check_branch
      %298 = sbr.rel (0) target = $region25
    $region24: #{tpu_custom_call.1} parent=1 // pred_region
      %299 = dma.done [#allocation6], 2048
    $region25: #{tpu_custom_call.1} parent=1 // pred_fallthru
      _
    %300 = vsyncpa [#allocation5], 1
    %301 = vsyncpa [#allocation6], 1

</llo_original>
